<compile_context>
chip_gen: v5e
topology: v5e:2x2
jax: 0.10.0
libtpu: 0.0.40
codegen_flags: <defaults>
</compile_context>

<pallas_src>
import jax
import jax.numpy as jnp
from jax.experimental import pallas as pl
from jax.experimental.pallas import tpu as pltpu


def _blur_kernel_roll(x_ref, o_ref):
    """Blur with shifts via pltpu.roll.  x_ref/o_ref: (BC, H, W) block.

    The blur is independent per channel (leading BC axis).  Used only when
    H % 8 == 0 and W % 128 == 0 (f32 tile alignment for the rotates).
    """
    x = x_ref[...].astype(jnp.float32)          # single promotion (no-op for f32)
    _, H, W = x.shape
    col = jax.lax.broadcasted_iota(jnp.int32, x.shape, 2)
    row_i = jax.lax.broadcasted_iota(jnp.int32, x.shape, 1)

    # ---- row pass along W (lane axis), reflect (mirror without edge) ----
    # pltpu.roll follows jnp.roll semantics: roll(x, s)[j] = x[(j - s) % W].
    xm1 = pltpu.roll(x, shift=1, axis=2)        # x[j-1]  (wraps at j=0)
    xp1 = pltpu.roll(x, shift=W - 1, axis=2)    # x[j+1]  (wraps at j=W-1)
    left = jnp.where(col == 0, xp1, xm1)        # reflect: left[0]    = x[1]
    right = jnp.where(col == W - 1, xm1, xp1)   # reflect: right[W-1] = x[W-2]
    row = (left + x) + (x + right)              # [1,2,1] via shift-add

    # ---- column pass along H (sublane axis), reflect ----
    rm1 = pltpu.roll(row, shift=1, axis=1)      # row[i-1]
    rp1 = pltpu.roll(row, shift=H - 1, axis=1)  # row[i+1]
    up = jnp.where(row_i == 0, rp1, rm1)
    down = jnp.where(row_i == H - 1, rm1, rp1)
    out = ((up + row) + (row + down)) * jnp.float32(1.0 / 16.0)
    o_ref[...] = out.astype(o_ref.dtype)


def _blur_kernel_concat(x_ref, o_ref):
    """Fallback for (H, W) not (8,128)-aligned: shifts via concat of static
    slices (proven lowering for small / odd feature maps)."""
    x = x_ref[...].astype(jnp.float32)          # promote once; keeps 16-bit
                                                # inputs on the proven f32 path
    # row pass along W (reflect: left[0]=x[1], right[W-1]=x[W-2])
    left = jnp.concatenate([x[:, :, 1:2], x[:, :, :-1]], axis=2)
    right = jnp.concatenate([x[:, :, 1:], x[:, :, -2:-1]], axis=2)
    row = (left + x) + (x + right)
    # column pass along H
    up = jnp.concatenate([row[:, 1:2, :], row[:, :-1, :]], axis=1)
    down = jnp.concatenate([row[:, 1:, :], row[:, -2:-1, :]], axis=1)
    out = ((up + row) + (row + down)) * jnp.float32(1.0 / 16.0)
    o_ref[...] = out.astype(o_ref.dtype)


# normalized 3x3 blur weights, for the pure-JAX reference
_BLUR_W = tuple(
    tuple(a * b / 16.0 for b in (1.0, 2.0, 1.0)) for a in (1.0, 2.0, 1.0)
)


def _reference_blur(x):
    """Pure-JAX reference: matches PyTorch filter2d(x, outer(f,f), normalized)."""
    xp = jnp.pad(x, ((0, 0), (0, 0), (1, 1), (1, 1)), mode="reflect")
    H, W = x.shape[2], x.shape[3]
    acc = jnp.zeros(x.shape, jnp.float32)
    for di in range(3):
        for dj in range(3):
            acc = acc + _BLUR_W[di][dj] * xp[:, :, di:di + H, dj:dj + W].astype(
                jnp.float32
            )
    return acc.astype(x.dtype)


_ROLL_OK = None


def _roll_path_ok():
    """One-time capability check: does the pltpu.roll kernel lower on this
    backend and match the reference (rotate semantics + alignment support)?
    Falls back to the concat kernel if not."""
    global _ROLL_OK
    if _ROLL_OK is None:
        try:
            x = jax.random.normal(jax.random.PRNGKey(1), (2, 8, 128), jnp.float32)
            out = pl.pallas_call(
                _blur_kernel_roll,
                out_shape=jax.ShapeDtypeStruct(x.shape, x.dtype),
            )(x)
            ref = _reference_blur(x[:, None])[:, 0]
            _ROLL_OK = bool(jnp.allclose(out, ref, atol=1e-5, rtol=1e-5))
        except Exception:
            _ROLL_OK = False
    return _ROLL_OK


def _round_up(a, b):
    return -(-a // b) * b


def _pick_block_channels(nc, h, w, dtype):
    """Channels per grid step, budgeted on the padded VMEM footprint
    (double-buffered in/out in native dtype + ~4 live f32 intermediates),
    capped so the grid has >= 2 steps (v7x 2-TC sharding + pipelining)."""
    itemsize = jnp.dtype(dtype).itemsize
    sublane = max(8, 32 // max(itemsize, 1))        # 8 (4B), 16 (2B), 32 (1B)
    pad_native = _round_up(h, sublane) * _round_up(w, 128) * itemsize
    pad_f32 = _round_up(h, 8) * _round_up(w, 128) * 4
    per_ch = 4 * pad_native + 4 * pad_f32           # 2x in + 2x out + intermediates
    budget = 40 * 1024 * 1024                       # headroom under 64 MiB VMEM
    bc = max(1, min(nc, budget // per_ch))
    if nc > 1:
        bc = min(bc, -(-nc // 2))                   # ensure grid >= 2
    return bc


def blur(x):
    """x: (N, C, H, W) -> (N, C, H, W); 3x3 [1,2,1]^T[1,2,1]/16, reflect pad."""
    N, C, H, W = x.shape
    assert H >= 2 and W >= 2, "reflect padding needs H, W >= 2"
    nc = N * C
    x2 = x.reshape(nc, H, W)                        # free reshape (NCHW contiguous)
    bc = _pick_block_channels(nc, H, W, x.dtype)
    grid = pl.cdiv(nc, bc)                          # partial last block is safe:
                                                    # per-channel op, OOB writes masked
    aligned = (H % 8 == 0) and (W % 128 == 0)
    kernel = _blur_kernel_roll if (aligned and _roll_path_ok()) else _blur_kernel_concat
    # TODO(synk): add H-halo tiling (overlapping row windows via manual DMA) so
    # planes much larger than ~1K x 1K f32 stay within v7x's 64 MiB VMEM.
    out = pl.pallas_call(
        kernel,
        out_shape=jax.ShapeDtypeStruct((nc, H, W), x.dtype),
        grid=(grid,),
        in_specs=[pl.BlockSpec((bc, H, W), lambda i: (i, 0, 0))],
        out_specs=pl.BlockSpec((bc, H, W), lambda i: (i, 0, 0)),
        compiler_params=pltpu.CompilerParams(
            dimension_semantics=("parallel",),
            vmem_limit_bytes=64 * 1024 * 1024,
        ),
    )(x2)
    return out.reshape(N, C, H, W)


if __name__ == "__main__":
    key = jax.random.PRNGKey(0)

    cases = [
        ((2, 4, 16, 16), jnp.float32),    # primary small-plane shape (concat path)
        ((1, 2, 3, 5), jnp.float32),      # tiny / odd dims (reflect edge cases)
        ((2, 2, 2, 2), jnp.float32),      # minimum size for reflect
        ((2, 4, 16, 16), jnp.bfloat16),   # bf16 path (f32 accumulation)
        ((1, 5, 16, 128), jnp.float32),   # (8,128)-aligned (roll path) + uneven grid
    ]

    ok = True
    for shape, dtype in cases:
        key, sub = jax.random.split(key)
        x = jax.random.normal(sub, shape, dtype=jnp.float32).astype(dtype)
        out = jax.block_until_ready(blur(x))
        ref = _reference_blur(x)
        assert out.shape == x.shape and out.dtype == x.dtype
        tol = 1e-5 if dtype == jnp.float32 else 2e-2
        if not jnp.allclose(out.astype(jnp.float32), ref.astype(jnp.float32),
                            atol=tol, rtol=tol):
            ok = False
            print("MISMATCH at", shape, dtype)

    if ok:
        print("KERNEL_OK")
</pallas_src>

<mosaic_0001>
module attributes {stable_mosaic.version = 11 : i64} {
  func.func @_blur_kernel_concat(%arg0: i32, %arg1: memref<4x16x16xf32, #tpu.memory_space<vmem>>, %arg2: memref<4x16x16xf32, #tpu.memory_space<vmem>>) attributes {dimension_semantics = [#tpu.dimension_semantics<parallel>], iteration_bounds = array<i64: 2>, scalar_prefetch = 0 : i64, scratch_operands = 0 : i64, tpu.core_type = #tpu.core_type<tc>, window_params = [{transform_indices = @transform_0, window_bounds = array<i64: 4, 16, 16>}, {transform_indices = @transform_1, window_bounds = array<i64: 4, 16, 16>}]} {
    %c0 = arith.constant 0 : index
    %c0_0 = arith.constant 0 : index
    %c0_1 = arith.constant 0 : index
    %0 = vector.load %arg1[%c0, %c0_0, %c0_1] : memref<4x16x16xf32, #tpu.memory_space<vmem>>, vector<4x16x16xf32>
    %1 = vector.extract_strided_slice %0 {offsets = [0, 0, 1], sizes = [4, 16, 1], strides = [1, 1, 1]} : vector<4x16x16xf32> to vector<4x16x1xf32>
    %2 = vector.extract_strided_slice %0 {offsets = [0, 0, 0], sizes = [4, 16, 15], strides = [1, 1, 1]} : vector<4x16x16xf32> to vector<4x16x15xf32>
    %3 = tpu.concatenate %1, %2 in 2 : vector<4x16x1xf32>, vector<4x16x15xf32> -> vector<4x16x16xf32>
    %4 = vector.extract_strided_slice %0 {offsets = [0, 0, 1], sizes = [4, 16, 15], strides = [1, 1, 1]} : vector<4x16x16xf32> to vector<4x16x15xf32>
    %5 = vector.extract_strided_slice %0 {offsets = [0, 0, 14], sizes = [4, 16, 1], strides = [1, 1, 1]} : vector<4x16x16xf32> to vector<4x16x1xf32>
    %6 = tpu.concatenate %4, %5 in 2 : vector<4x16x15xf32>, vector<4x16x1xf32> -> vector<4x16x16xf32>
    %7 = arith.addf %3, %0 : vector<4x16x16xf32>
    %8 = arith.addf %0, %6 : vector<4x16x16xf32>
    %9 = arith.addf %7, %8 : vector<4x16x16xf32>
    %10 = vector.extract_strided_slice %9 {offsets = [0, 1, 0], sizes = [4, 1, 16], strides = [1, 1, 1]} : vector<4x16x16xf32> to vector<4x1x16xf32>
    %11 = vector.extract_strided_slice %9 {offsets = [0, 0, 0], sizes = [4, 15, 16], strides = [1, 1, 1]} : vector<4x16x16xf32> to vector<4x15x16xf32>
    %12 = tpu.concatenate %10, %11 in 1 : vector<4x1x16xf32>, vector<4x15x16xf32> -> vector<4x16x16xf32>
    %13 = vector.extract_strided_slice %9 {offsets = [0, 1, 0], sizes = [4, 15, 16], strides = [1, 1, 1]} : vector<4x16x16xf32> to vector<4x15x16xf32>
    %14 = vector.extract_strided_slice %9 {offsets = [0, 14, 0], sizes = [4, 1, 16], strides = [1, 1, 1]} : vector<4x16x16xf32> to vector<4x1x16xf32>
    %15 = tpu.concatenate %13, %14 in 1 : vector<4x15x16xf32>, vector<4x1x16xf32> -> vector<4x16x16xf32>
    %16 = arith.addf %12, %9 : vector<4x16x16xf32>
    %17 = arith.addf %9, %15 : vector<4x16x16xf32>
    %18 = arith.addf %16, %17 : vector<4x16x16xf32>
    %cst = arith.constant 6.250000e-02 : f32
    %19 = vector.broadcast %cst : f32 to vector<4x16x16xf32>
    %20 = arith.mulf %18, %19 : vector<4x16x16xf32>
    %c0_2 = arith.constant 0 : index
    %c0_3 = arith.constant 0 : index
    %c0_4 = arith.constant 0 : index
    %21 = vector.load %arg2[%c0_2, %c0_3, %c0_4] : memref<4x16x16xf32, #tpu.memory_space<vmem>>, vector<4x16x16xf32>
    tpu.vector_store %arg2[%c0_2, %c0_3, %c0_4], %20 {strides = array<i32>} : memref<4x16x16xf32, #tpu.memory_space<vmem>>, vector<4x16x16xf32>,
    return
  }
  func.func @transform_0(%arg0: i32) -> (i32, i32, i32) {
    %c0_i32 = arith.constant 0 : i32
    %c0_i32_0 = arith.constant 0 : i32
    %c0_i32_1 = arith.constant 0 : i32
    return %arg0, %c0_i32, %c0_i32_0 : i32, i32, i32
  }
  func.func @transform_1(%arg0: i32) -> (i32, i32, i32) {
    %c0_i32 = arith.constant 0 : i32
    %c0_i32_0 = arith.constant 0 : i32
    %c0_i32_1 = arith.constant 0 : i32
    return %arg0, %c0_i32, %c0_i32_0 : i32, i32, i32
  }
}

</mosaic_0001>

<llo_original>
// kernel: tpu_custom_call.1
$region0: #{tpu_custom_call.1}
  #allocation0 [shape = 'u32[]', space=smem, size = 0x4, offset = 0x4, fixed_abs, tag = 'smem constant byte address 0x4 - core index']
  #allocation1 [shape = 'u32[72,128]{1,0:T(1,128)}', space=vmem, size = 0x9000, scoped, tag = 'internal scratch']
  %s0 = inlined_call_operand.hbm [shape: f32[8,16,16], index: 0, kind: input, shape index: {}]
  %s1 = inlined_call_operand.hbm [shape: f32[8,16,16], index: 1, kind: output, shape index: {}]
  %s2 = sld [smem:[#allocation0]]
  $region41: #{tpu_custom_call.1} parent=0
    _
  %s4 = ssub.s32 1, %s2
  %s5 = scalar_select 0, %s4, %s2
  $region1: #{tpu_custom_call.1} parent=0
    #allocation2 [shape = 'u8[65536]{0}', space=vmem, size = 0x10000, scoped, tag = 'input window, operand 0']
    #allocation3 [shape = 's32[2]{0}', space=sflag, size = 0x8, scoped, tag = 'scoped memory for tpu_custom_call.1']
    #allocation4 [shape = 's32[2]{0}', space=sflag, size = 0x8, scoped, tag = 'scoped memory for tpu_custom_call.1']
    #allocation5 [shape = 'u8[65536]{0}', space=vmem, size = 0x10000, scoped, tag = 'output window, operand 0']
    %6 = vsyncpa [#allocation3], 0
    %s7 = scalar_lea.sflag [#allocation3], 1
    %8 = vsyncpa %s7, 0
    %9 = vsyncpa [#allocation4], 0
    %s10 = scalar_lea.sflag [#allocation4], 1
    %11 = vsyncpa %s10, 0
    loop: start=0, step=1, limit=4
    $region2: #{tpu_custom_call.1} parent=1 // loop_pre_header
      _
    $region3: #{tpu_custom_call.1} parent=1 // loop_header
      %s13 = sphi 0, %s17
      %p14 = scmp.ge.s32.totalorder %s13, 4
      %s23 = sphi 0, %s25
      %s26 = sphi 0, %s23
      %s27 = sphi 0, %s26
      %s43 = sphi 0, %s27
      %s49 = sphi 0, %s51
      %s52 = sphi 0, %s49
      %s53 = sphi 0, %s52
      %s69 = sphi 0, %s53
    $region4: #{tpu_custom_call.1} parent=1 // loop_header_branch
      %16 = sbr.rel (%p14) target = $region8
    $region5: #{tpu_custom_call.1} parent=1 // loop_body
      %s18 = ssub.s32 %s13, 1
      %s19 = ssub.s32 %s13, 2
      %s20 = sadd.s32 %s13, 1
      %s21 = ssub.s32 %s13, %s20
      %p22 = scmp.eq.s32.totalorder %s21, 0
      %s24 = sadd.s32 %s23, 1
      %s25 = scalar_select %p22, %s23, %s24
      %p28 = pneg %p22
      %p29 = scmp.eq.s32.totalorder %s13, 1
      %p30 = por %p28, %p29
      %p31 = scmp.ne.s32.totalorder %s23, %s26
      %p32 = scmp.eq.s32.totalorder %s13, 0
      %p33 = por %p31, %p32
      %p34 = scmp.ne.s32.totalorder %s23, %s26
      %p35 = scmp.eq.s32.totalorder %s18, 1
      %p36 = por %p34, %p35
      %p37 = scmp.ne.s32.totalorder %s26, %s27
      %p38 = scmp.eq.s32.totalorder %s18, 0
      %p39 = por %p37, %p38
      %p40 = scmp.ne.s32.totalorder %s26, %s27
      %p41 = scmp.eq.s32.totalorder %s19, 1
      %p42 = por %p40, %p41
      %p44 = scmp.ne.s32.totalorder %s27, %s43
      %p45 = scmp.eq.s32.totalorder %s19, 0
      %p46 = por %p44, %p45
      %s47 = ssub.s32 %s13, %s20
      %p48 = scmp.eq.s32.totalorder %s47, 0
      %s50 = sadd.s32 %s49, 1
      %s51 = scalar_select %p48, %s49, %s50
      %p54 = pneg %p48
      %p55 = scmp.eq.s32.totalorder %s13, 1
      %p56 = por %p54, %p55
      %p57 = scmp.ne.s32.totalorder %s49, %s52
      %p58 = scmp.eq.s32.totalorder %s13, 0
      %p59 = por %p57, %p58
      %p60 = scmp.ne.s32.totalorder %s49, %s52
      %p61 = scmp.eq.s32.totalorder %s18, 1
      %p62 = por %p60, %p61
      %p63 = scmp.ne.s32.totalorder %s52, %s53
      %p64 = scmp.eq.s32.totalorder %s18, 0
      %p65 = por %p63, %p64
      %p66 = scmp.ne.s32.totalorder %s52, %s53
      %p67 = scmp.eq.s32.totalorder %s19, 1
      %p68 = por %p66, %p67
      %p70 = scmp.ne.s32.totalorder %s53, %s69
      %p71 = scmp.eq.s32.totalorder %s19, 0
      %p72 = por %p70, %p71
      %p73 = scmp.le.s32.totalorder 1, %s13
      %p74 = scmp.lt.s32.totalorder %s13, 3
      %p75 = pnand %p73, %p74
      %p76 = pneg %p75
      // Predicated region
      $region9: #{tpu_custom_call.1} parent=5 // pred_check
        _
      $region10: #{tpu_custom_call.1} parent=5 // pred_check_branch
        %78 = sbr.rel (%p75) target = $region12
      $region11: #{tpu_custom_call.1} parent=5 // pred_region
        %s79 = ssub.s32 %s13, 1
      $region12: #{tpu_custom_call.1} parent=5 // pred_fallthru
        _
      %p80 = scmp.lt.s32.totalorder %s13, 2
      // Predicated region
      $region13: #{tpu_custom_call.1} parent=5 // pred_check
        %p81 = pneg %p80
      $region14: #{tpu_custom_call.1} parent=5 // pred_check_branch
        %83 = sbr.rel (%p81) target = $region16
      $region15: #{tpu_custom_call.1} parent=5 // pred_region
        // Predicated region
        $region17: #{tpu_custom_call.1} parent=15 // pred_check
          %p84 = pneg %p33
        $region18: #{tpu_custom_call.1} parent=15 // pred_check_branch
          %86 = sbr.rel (%p84) target = $region20
        $region19: #{tpu_custom_call.1} parent=15 // pred_region
          %s87 = sand.u32 %s23, 1
          %s88 = scalar_lea.sflag [#allocation3], %s87
          %s89 = sand.u32 %s23, 1
          %s90 = smul.addr %s89, 64
          %s91 = scalar_lea.vmem [#allocation2], %s90
          %s92 = smul.u32 4, %s13
          %94 = vsyncadd %s88, 0
          %s95 = smul.addr %s92, 2
          %s96 = smul.addr %s95, 8
          %s97 = scalar_lea.hbm %s0, %s96
          %s98 = sshll.u32 %s97, 4
          %s99 = int_to_ptr.hbm [resolvable:$true] %s98
          %s100 = sshll.u32 %s91, 4
          %s101 = int_to_ptr.vmem [resolvable:$true] %s100
          %106 = dma.hbm_to_vmem [thread:$0]  %s99, 1024, %s101, %s88, 128, 128, 8
        $region20: #{tpu_custom_call.1} parent=15 // pred_fallthru
          _
      $region16: #{tpu_custom_call.1} parent=5 // pred_fallthru
        _
      %p107 = scmp.le.s32.totalorder 1, %s13
      %p108 = scmp.lt.s32.totalorder %s13, 3
      %p109 = pnand %p107, %p108
      %p110 = pneg %p109
      // Predicated region
      $region21: #{tpu_custom_call.1} parent=5 // pred_check
        _
      $region22: #{tpu_custom_call.1} parent=5 // pred_check_branch
        %112 = sbr.rel (%p109) target = $region24
      $region23: #{tpu_custom_call.1} parent=5 // pred_region
        %s113 = ssub.s32 %s13, 1
        %s114 = sand.u32 %s26, 1
        %s115 = scalar_lea.sflag [#allocation3], %s114
        %s116 = sand.u32 %s26, 1
        %s117 = smul.addr %s116, 64
        %s118 = scalar_lea.vmem [#allocation2], %s117
        // Predicated region
        $region25: #{tpu_custom_call.1} parent=23 // pred_check
          %p119 = pneg %p39
        $region26: #{tpu_custom_call.1} parent=23 // pred_check_branch
          %121 = sbr.rel (%p119) target = $region28
        $region27: #{tpu_custom_call.1} parent=23 // pred_region
          %123 = dma.done %s115, 1024
        $region28: #{tpu_custom_call.1} parent=23 // pred_fallthru
          _
        %s124 = sand.u32 %s26, 1
        %s125 = scalar_lea.sflag [#allocation3], %s124
        %s126 = sand.u32 %s26, 1
        %s127 = smul.addr %s126, 64
        %s128 = scalar_lea.vmem [#allocation2], %s127
        %p129 = pneg %p39
        %p130 = pneg %p36
        %p131 = pneg %p65
        %p132 = pneg %p62
        %s133 = sand.u32 %s52, 1
        %s134 = scalar_lea.sflag [#allocation4], %s133
        %s135 = sand.u32 %s52, 1
        %s136 = smul.addr %s135, 64
        %s137 = scalar_lea.vmem [#allocation5], %s136
        %s138 = smul.u32 4, %s18
        %s139 = smul.u32 4, %s18
        %v140 = vld [vmem:[%s118] sm:$0xff]
        %v141 = vld [vmem:[%s118 + $0x8] sm:$0xff]
        %v142 = vld [vmem:[%s118 + $0x10] sm:$0xff]
        %v143 = vld [vmem:[%s118 + $0x18] sm:$0xff]
        %v144 = vld [vmem:[%s118 + $0x20] sm:$0xff]
        %v145 = vld [vmem:[%s118 + $0x28] sm:$0xff]
        %v146 = vld [vmem:[%s118 + $0x30] sm:$0xff]
        %v147 = vld [vmem:[%s118 + $0x38] sm:$0xff]
        %156 = vrot.lane.b32.xlu0 %v140, 127
        %v157 = vpop.permute.xlu0 %156
        %158 = vrot.lane.b32.xlu0 %v141, 127
        %v159 = vpop.permute.xlu0 %158
        %160 = vrot.lane.b32.xlu0 %v142, 127
        %v161 = vpop.permute.xlu0 %160
        %162 = vrot.lane.b32.xlu0 %v143, 127
        %v163 = vpop.permute.xlu0 %162
        %164 = vrot.lane.b32.xlu0 %v144, 127
        %v165 = vpop.permute.xlu0 %164
        %166 = vrot.lane.b32.xlu0 %v145, 127
        %v167 = vpop.permute.xlu0 %166
        %168 = vrot.lane.b32.xlu0 %v146, 127
        %v169 = vpop.permute.xlu0 %168
        %170 = vrot.lane.b32.xlu0 %v147, 127
        %v171 = vpop.permute.xlu0 %170
        %180 = vrot.lane.b32.xlu0 %v140, 1
        %v181 = vpop.permute.xlu0 %180
        %182 = vrot.lane.b32.xlu0 %v141, 1
        %v183 = vpop.permute.xlu0 %182
        %184 = vrot.lane.b32.xlu0 %v142, 1
        %v185 = vpop.permute.xlu0 %184
        %186 = vrot.lane.b32.xlu0 %v143, 1
        %v187 = vpop.permute.xlu0 %186
        %188 = vrot.lane.b32.xlu0 %v144, 1
        %v189 = vpop.permute.xlu0 %188
        %190 = vrot.lane.b32.xlu0 %v145, 1
        %v191 = vpop.permute.xlu0 %190
        %192 = vrot.lane.b32.xlu0 %v146, 1
        %v193 = vpop.permute.xlu0 %192
        %194 = vrot.lane.b32.xlu0 %v147, 1
        %v195 = vpop.permute.xlu0 %194
        %vm204 = vcmask 7168
        %v205 = vsel %vm204, %v157, %v181
        %v206 = vsel %vm204, %v159, %v183
        %v207 = vsel %vm204, %v161, %v185
        %v208 = vsel %vm204, %v163, %v187
        %v209 = vsel %vm204, %v165, %v189
        %v210 = vsel %vm204, %v167, %v191
        %v211 = vsel %vm204, %v169, %v193
        %v212 = vsel %vm204, %v171, %v195
        %vm213 = vcmask 121856
        %v214 = vsel %vm213, %v157, %v181
        %v215 = vsel %vm213, %v159, %v183
        %v216 = vsel %vm213, %v161, %v185
        %v217 = vsel %vm213, %v163, %v187
        %v218 = vsel %vm213, %v165, %v189
        %v219 = vsel %vm213, %v167, %v191
        %v220 = vsel %vm213, %v169, %v193
        %v221 = vsel %vm213, %v171, %v195
        %v222 = vadd.f32 %v205, %v140
        %v223 = vadd.f32 %v206, %v141
        %v224 = vadd.f32 %v207, %v142
        %v225 = vadd.f32 %v208, %v143
        %v226 = vadd.f32 %v209, %v144
        %v227 = vadd.f32 %v210, %v145
        %v228 = vadd.f32 %v211, %v146
        %v229 = vadd.f32 %v212, %v147
        %v230 = vadd.f32 %v140, %v214
        %v231 = vadd.f32 %v141, %v215
        %v232 = vadd.f32 %v142, %v216
        %v233 = vadd.f32 %v143, %v217
        %v234 = vadd.f32 %v144, %v218
        %v235 = vadd.f32 %v145, %v219
        %v236 = vadd.f32 %v146, %v220
        %v237 = vadd.f32 %v147, %v221
        %v238 = vadd.f32 %v222, %v230
        %v239 = vadd.f32 %v223, %v231
        %v240 = vadd.f32 %v224, %v232
        %v241 = vadd.f32 %v225, %v233
        %v242 = vadd.f32 %v226, %v234
        %v243 = vadd.f32 %v227, %v235
        %v244 = vadd.f32 %v228, %v236
        %v245 = vadd.f32 %v229, %v237
        %v250 = vrot.slane %v238, 1
        %v251 = vrot.slane %v240, 1
        %v252 = vrot.slane %v242, 1
        %v253 = vrot.slane %v244, 1
        %vm262 = vcmask 1040384
        %v263 = vrot.slane %v238, 7
        %v264 = vrot.slane %v239, 7
        %v265 = vsel %vm262, %v263, %v264
        %v266 = vrot.slane %v240, 7
        %v267 = vrot.slane %v241, 7
        %v268 = vsel %vm262, %v266, %v267
        %v269 = vrot.slane %v242, 7
        %v270 = vrot.slane %v243, 7
        %v271 = vsel %vm262, %v269, %v270
        %v272 = vrot.slane %v244, 7
        %v273 = vrot.slane %v245, 7
        %v274 = vsel %vm262, %v272, %v273
        %v283 = vsel %vm262, %v250, %v263
        %v284 = vsel %vm262, %v251, %v266
        %v285 = vsel %vm262, %v252, %v269
        %v286 = vsel %vm262, %v253, %v272
        %vm287 = vcmask 1046528
        %v288 = vrot.slane %v239, 1
        %v289 = vsel %vm287, %v250, %v288
        %v290 = vrot.slane %v241, 1
        %v291 = vsel %vm287, %v251, %v290
        %v292 = vrot.slane %v243, 1
        %v293 = vsel %vm287, %v252, %v292
        %v294 = vrot.slane %v245, 1
        %v295 = vsel %vm287, %v253, %v294
        %v308 = vsel %vm287, %v288, %v264
        %v309 = vsel %vm287, %v290, %v267
        %v310 = vsel %vm287, %v292, %v270
        %v311 = vsel %vm287, %v294, %v273
        %v312 = vadd.f32 %v283, %v238
        %v313 = vadd.f32 %v265, %v239
        %v314 = vadd.f32 %v284, %v240
        %v315 = vadd.f32 %v268, %v241
        %v316 = vadd.f32 %v285, %v242
        %v317 = vadd.f32 %v271, %v243
        %v318 = vadd.f32 %v286, %v244
        %v319 = vadd.f32 %v274, %v245
        %v320 = vadd.f32 %v238, %v289
        %v321 = vadd.f32 %v239, %v308
        %v322 = vadd.f32 %v240, %v291
        %v323 = vadd.f32 %v241, %v309
        %v324 = vadd.f32 %v242, %v293
        %v325 = vadd.f32 %v243, %v310
        %v326 = vadd.f32 %v244, %v295
        %v327 = vadd.f32 %v245, %v311
        %v328 = vadd.f32 %v312, %v320
        %v329 = vadd.f32 %v313, %v321
        %v330 = vadd.f32 %v314, %v322
        %v331 = vadd.f32 %v315, %v323
        %v332 = vadd.f32 %v316, %v324
        %v333 = vadd.f32 %v317, %v325
        %v334 = vadd.f32 %v318, %v326
        %v335 = vadd.f32 %v319, %v327
        %v336 = vmul.f32 %v328, 0.0625
        %v337 = vmul.f32 %v329, 0.0625
        %v338 = vmul.f32 %v330, 0.0625
        %v339 = vmul.f32 %v331, 0.0625
        %v340 = vmul.f32 %v332, 0.0625
        %v341 = vmul.f32 %v333, 0.0625
        %v342 = vmul.f32 %v334, 0.0625
        %v343 = vmul.f32 %v335, 0.0625
        %vm344 = vcmask 130048
        %345 = vst.msk [vmem:[%s137] sm:$0xff] %vm344, %v336
        %346 = vst.msk [vmem:[%s137 + $0x8] sm:$0xff] %vm344, %v337
        %347 = vst.msk [vmem:[%s137 + $0x10] sm:$0xff] %vm344, %v338
        %348 = vst.msk [vmem:[%s137 + $0x18] sm:$0xff] %vm344, %v339
        %349 = vst.msk [vmem:[%s137 + $0x20] sm:$0xff] %vm344, %v340
        %350 = vst.msk [vmem:[%s137 + $0x28] sm:$0xff] %vm344, %v341
        %351 = vst.msk [vmem:[%s137 + $0x30] sm:$0xff] %vm344, %v342
        %352 = vst.msk [vmem:[%s137 + $0x38] sm:$0xff] %vm344, %v343
        %s353 = sand.u32 %s52, 1
        %s354 = scalar_lea.sflag [#allocation4], %s353
        %s355 = sand.u32 %s52, 1
        %s356 = smul.addr %s355, 64
        %s357 = scalar_lea.vmem [#allocation5], %s356
        // Predicated region
        $region29: #{tpu_custom_call.1} parent=23 // pred_check
          %p358 = pneg %p62
        $region30: #{tpu_custom_call.1} parent=23 // pred_check_branch
          %360 = sbr.rel (%p358) target = $region32
        $region31: #{tpu_custom_call.1} parent=23 // pred_region
          %s361 = smul.u32 4, %s18
          %363 = vsyncadd %s354, 0
          %s364 = smul.addr %s361, 2
          %s365 = smul.addr %s364, 8
          %s366 = scalar_lea.hbm %s1, %s365
          %s367 = sshll.u32 %s357, 4
          %s368 = int_to_ptr.vmem [resolvable:$true] %s367
          %s369 = sshll.u32 %s366, 4
          %s370 = int_to_ptr.hbm [resolvable:$true] %s369
          %375 = dma.vmem_to_hbm [thread:$0]  %s368, 1024, %s370, %s354, 128, 128, 8
        $region32: #{tpu_custom_call.1} parent=23 // pred_fallthru
          _
      $region24: #{tpu_custom_call.1} parent=5 // pred_fallthru
        _
      %p376 = scmp.le.s32.totalorder 2, %s13
      // Predicated region
      $region33: #{tpu_custom_call.1} parent=5 // pred_check
        %p377 = pneg %p376
      $region34: #{tpu_custom_call.1} parent=5 // pred_check_branch
        %379 = sbr.rel (%p377) target = $region36
      $region35: #{tpu_custom_call.1} parent=5 // pred_region
        %s380 = ssub.s32 %s13, 2
        // Predicated region
        $region37: #{tpu_custom_call.1} parent=35 // pred_check
          %p381 = pneg %p68
        $region38: #{tpu_custom_call.1} parent=35 // pred_check_branch
          %383 = sbr.rel (%p381) target = $region40
        $region39: #{tpu_custom_call.1} parent=35 // pred_region
          %s384 = sand.u32 %s53, 1
          %s385 = scalar_lea.sflag [#allocation4], %s384
          %s386 = sand.u32 %s53, 1
          %s387 = smul.addr %s386, 64
          %s388 = scalar_lea.vmem [#allocation5], %s387
          %390 = dma.done %s385, 1024
        $region40: #{tpu_custom_call.1} parent=35 // pred_fallthru
          _
      $region36: #{tpu_custom_call.1} parent=5 // pred_fallthru
        _
    $region6: #{tpu_custom_call.1} parent=1 // loop_footer
      %s17 = sadd.s32 1, %s13
    $region7: #{tpu_custom_call.1} parent=1 // loop_footer_branch
      %12 = sbr.rel target = $region3
    $region8: #{tpu_custom_call.1} parent=1 // loop_exit
      _
    %391 = vsyncpa [#allocation3], 1
    %s392 = scalar_lea.sflag [#allocation3], 1
    %393 = vsyncpa %s392, 1
    %394 = vsyncpa [#allocation4], 1
    %s395 = scalar_lea.sflag [#allocation4], 1
    %396 = vsyncpa %s395, 1

</llo_original>
